<compile_context>
chip_gen: v5e
topology: v5e:2x2
jax: 0.10.0
libtpu: 0.0.40
codegen_flags: <defaults>
</compile_context>

<pallas_src>
import numpy as np
import jax
import jax.numpy as jnp
from jax.experimental import pallas as pl
from jax.experimental.pallas import tpu as pltpu


# ---------------------------------------------------------------------------
# Bilinear interpolation operators (PyTorch align_corners=False semantics)
# ---------------------------------------------------------------------------
def _interp_matrix_1d(out_size, in_size):
    scale = in_size / out_size
    A = np.zeros((out_size, in_size), dtype=np.float32)
    for o in range(out_size):
        src = max((o + 0.5) * scale - 0.5, 0.0)        # PyTorch clamps negative coords
        i0 = min(int(np.floor(src)), in_size - 1)
        i1 = min(i0 + 1, in_size - 1)
        w1 = src - i0
        A[o, i0] += 1.0 - w1
        A[o, i1] += w1
    return A


def _bilinear_kron(h_out, w_out, h_in, w_in):
    """(H_in*W_in, H_out*W_out) operator K s.t. x_flat @ K == flat(resize(x))."""
    Ah = _interp_matrix_1d(h_out, h_in)
    Aw = _interp_matrix_1d(w_out, w_in)
    return np.kron(Ah, Aw).T.astype(np.float32)


# ---------------------------------------------------------------------------
# Pallas kernels
# ---------------------------------------------------------------------------
def _make_batched_kernel(N, P1):
    """Grid-less kernel: whole batch in one invocation, channel matmuls batched over N."""

    def kernel(x1_ref, x2_ref, x3_ref, k2_ref, k3_ref,
               wf_ref, bf_ref, ws_ref, bs_ref, out_ref):
        k2 = k2_ref[...]                      # (P2, P1) bf16
        k3 = k3_ref[...]                      # (P3, P1) bf16

        # --- agg_res: one upsample matmul per level per n, fused kept in vregs ---
        cols = []
        for n in range(N):                    # N is tiny -> static unroll
            up2 = jnp.dot(x2_ref[n], k2, preferred_element_type=jnp.float32)
            up3 = jnp.dot(x3_ref[n], k3, preferred_element_type=jnp.float32)
            cols.append(x1_ref[n] + up2 + up3)             # (C, P1) f32
        fused = cols[0] if N == 1 else jnp.concatenate(cols, axis=-1)   # (C, N*P1)

        # --- linear_fuse: 1x1 conv + folded BatchNorm + ReLU (whole batch) ------
        h = jnp.dot(wf_ref[...], fused.astype(jnp.bfloat16),
                    preferred_element_type=jnp.float32) + bf_ref[...]
        h = jnp.maximum(h, 0.0).astype(jnp.bfloat16)

        # --- cls_seg: dropout = identity (eval); 1x1 conv to classes ------------
        out = jnp.dot(ws_ref[...], h, preferred_element_type=jnp.float32) + bs_ref[...]
        for n in range(N):                    # 256-lane-aligned slices
            out_ref[n] = out[:, n * P1:(n + 1) * P1].astype(out_ref.dtype)

    return kernel


def _per_item_kernel(x1_ref, x2_ref, x3_ref, k2_ref, k3_ref,
                     wf_ref, bf_ref, ws_ref, bs_ref, out_ref):
    """One batch item per grid step (for sharding across v7x's two TensorCores)."""
    up2 = jnp.dot(x2_ref[...], k2_ref[...], preferred_element_type=jnp.float32)
    up3 = jnp.dot(x3_ref[...], k3_ref[...], preferred_element_type=jnp.float32)
    fused = x1_ref[...] + up2 + up3                          # (C, P1) f32, in vregs
    h = jnp.dot(wf_ref[...], fused.astype(jnp.bfloat16),
                preferred_element_type=jnp.float32) + bf_ref[...]
    h = jnp.maximum(h, 0.0).astype(jnp.bfloat16)
    out = jnp.dot(ws_ref[...], h, preferred_element_type=jnp.float32) + bs_ref[...]
    out_ref[...] = out.astype(out_ref.dtype)


# ---------------------------------------------------------------------------
# Wrapper
# ---------------------------------------------------------------------------
def simple_head_forward(inputs_nchw, params, *, batch_parallel_grid=False):
    # selected_id = [1, 2, 3]
    x1, x2, x3 = (inputs_nchw[i] for i in (1, 2, 3))
    N, C, H1, W1 = x1.shape
    _, _, H2, W2 = x2.shape
    _, _, H3, W3 = x3.shape
    P1, P2, P3 = H1 * W1, H2 * W2, H3 * W3
    K = params["w_seg"].shape[0]

    # Channels-first, lane-dense layouts: pure reshapes, no relayouts.
    x1f = x1.reshape(N, C, P1)                               # f32
    x2f = x2.reshape(N, C, P2).astype(jnp.bfloat16)
    x3f = x3.reshape(N, C, P3).astype(jnp.bfloat16)

    # Dense bilinear operators (align_corners=False), bf16 for the MXU fast path.
    k2 = jnp.asarray(_bilinear_kron(H1, W1, H2, W2), dtype=jnp.bfloat16)  # (P2, P1)
    k3 = jnp.asarray(_bilinear_kron(H1, W1, H3, W3), dtype=jnp.bfloat16)  # (P3, P1)

    # Fold eval-mode BatchNorm into the linear_fuse 1x1 conv.
    scale = params["bn_gamma"] / jnp.sqrt(params["bn_var"] + params["bn_eps"])
    shift = params["bn_beta"] - params["bn_mean"] * scale
    wf = (scale[:, None] * params["w_fuse"]).astype(jnp.bfloat16)   # (C, C)
    bf = shift.reshape(C, 1).astype(jnp.float32)
    ws = params["w_seg"].astype(jnp.bfloat16)                       # (K, C)
    bs = params["b_seg"].reshape(K, 1).astype(jnp.float32)

    args = (x1f, x2f, x3f, k2, k3, wf, bf, ws, bs)
    out_shape = jax.ShapeDtypeStruct((N, K, P1), jnp.float32)

    if batch_parallel_grid:
        # v7x: one batch item per grid step, sharded across TensorCores.
        def fixed(shape):
            return pl.BlockSpec(shape, lambda n: (0,) * len(shape))

        def per_n(shape):
            return pl.BlockSpec((None,) + shape, lambda n: (n, 0, 0))

        out = pl.pallas_call(
            _per_item_kernel,
            out_shape=out_shape,
            grid=(N,),
            in_specs=[per_n((C, P1)), per_n((C, P2)), per_n((C, P3)),
                      fixed((P2, P1)), fixed((P3, P1)),
                      fixed((C, C)), fixed((C, 1)),
                      fixed((K, C)), fixed((K, 1))],
            out_specs=per_n((K, P1)),
            compiler_params=pltpu.CompilerParams(
                dimension_semantics=("parallel",)),
        )(*args)
    else:
        # v5e / v6e (single TensorCore): one grid-less invocation, matmuls
        # batched over N -> fewer MXU fill/drain sequences, one bias/ReLU pass.
        vmem = pl.BlockSpec(memory_space=pltpu.MemorySpace.VMEM)
        out = pl.pallas_call(
            _make_batched_kernel(N, P1),
            out_shape=out_shape,
            in_specs=[vmem] * 9,
            out_specs=vmem,
        )(*args)

    # Already channels-first: unflatten spatial -> (N, num_classes, H1, W1)
    return out.reshape(N, K, H1, W1)


# ---------------------------------------------------------------------------
# Deterministic parameter init (shapes per SimpleHead.__init__)
# ---------------------------------------------------------------------------
def init_params(key, channel, num_classes):
    k1, k2, k3, k4, k5, k6, k7 = jax.random.split(key, 7)
    return dict(
        # linear_fuse conv weight (C_out, C_in, 1, 1) squeezed to (C_out, C_in)
        w_fuse=0.05 * jax.random.normal(k1, (channel, channel), jnp.float32),
        bn_gamma=1.0 + 0.1 * jax.random.normal(k2, (channel,), jnp.float32),
        bn_beta=0.1 * jax.random.normal(k3, (channel,), jnp.float32),
        bn_mean=0.1 * jax.random.normal(k4, (channel,), jnp.float32),
        bn_var=jnp.abs(jax.random.normal(k5, (channel,), jnp.float32)) + 0.5,
        bn_eps=1e-5,
        # conv_seg weight (num_classes, C, 1, 1) -> (num_classes, C); bias (num_classes,)
        w_seg=0.05 * jax.random.normal(k6, (num_classes, channel), jnp.float32),
        b_seg=0.05 * jax.random.normal(k7, (num_classes,), jnp.float32),
    )


# ---------------------------------------------------------------------------
# Pure-JAX f32 reference (module semantics) for correctness checking
# ---------------------------------------------------------------------------
def reference_forward(inputs_nchw, params):
    x1, x2, x3 = (inputs_nchw[i] for i in (1, 2, 3))
    N, C, H1, W1 = x1.shape

    def up(x):
        Ah = jnp.asarray(_interp_matrix_1d(H1, x.shape[2]))
        Aw = jnp.asarray(_interp_matrix_1d(W1, x.shape[3]))
        return jnp.einsum("oh,nchw,pw->ncop", Ah, x, Aw)

    fused = x1 + up(x2) + up(x3)
    y = jnp.einsum("dc,nchw->ndhw", params["w_fuse"], fused)
    inv = 1.0 / jnp.sqrt(params["bn_var"] + params["bn_eps"])
    y = ((y - params["bn_mean"][None, :, None, None])
         * (params["bn_gamma"] * inv)[None, :, None, None]
         + params["bn_beta"][None, :, None, None])
    y = jnp.maximum(y, 0.0)
    return (jnp.einsum("kc,nchw->nkhw", params["w_seg"], y)
            + params["b_seg"][None, :, None, None])


if __name__ == "__main__":
    key = jax.random.PRNGKey(0)
    channel, num_classes, N = 32, 19, 2
    kx, kp = jax.random.split(key)
    ks = jax.random.split(kx, 4)
    # 4-level feature pyramid; selected_id = [1, 2, 3] (inputs[0] is unused)
    inputs = [
        jax.random.normal(ks[0], (N, channel, 32, 32), jnp.float32),
        jax.random.normal(ks[1], (N, channel, 16, 16), jnp.float32),
        jax.random.normal(ks[2], (N, channel, 8, 8), jnp.float32),
        jax.random.normal(ks[3], (N, channel, 4, 4), jnp.float32),
    ]
    params = init_params(kp, channel, num_classes)
    ref = reference_forward(inputs, params)

    # Default path (grid-less, batched channel matmuls).
    out = jax.block_until_ready(simple_head_forward(inputs, params))
    assert out.shape == (N, num_classes, 16, 16), out.shape
    # bf16 MXU operands with f32 accumulation -> relaxed tolerance vs f32 ref.
    np.testing.assert_allclose(np.asarray(out), np.asarray(ref),
                               atol=2e-2, rtol=2e-2)

    # Batch-parallel grid path (shards batch items across TensorCores on v7x;
    # negligible extra per-step overhead on single-core chips).
    out_p = jax.block_until_ready(
        simple_head_forward(inputs, params, batch_parallel_grid=True))
    np.testing.assert_allclose(np.asarray(out_p), np.asarray(ref),
                               atol=2e-2, rtol=2e-2)

    print("KERNEL_OK")
</pallas_src>

<mosaic_0001>
module attributes {stable_mosaic.version = 11 : i64} {
  func.func @kernel(%arg0: memref<2x32x256xf32, #tpu.memory_space<vmem>>, %arg1: memref<2x32x64xbf16, #tpu.memory_space<vmem>>, %arg2: memref<2x32x16xbf16, #tpu.memory_space<vmem>>, %arg3: memref<64x256xbf16, #tpu.memory_space<vmem>>, %arg4: memref<16x256xbf16, #tpu.memory_space<vmem>>, %arg5: memref<32x32xbf16, #tpu.memory_space<vmem>>, %arg6: memref<32x1xf32, #tpu.memory_space<vmem>>, %arg7: memref<19x32xbf16, #tpu.memory_space<vmem>>, %arg8: memref<19x1xf32, #tpu.memory_space<vmem>>, %arg9: memref<2x19x256xf32, #tpu.memory_space<vmem>>) attributes {dimension_semantics = [], scalar_prefetch = 0 : i64, scratch_operands = 0 : i64, tpu.core_type = #tpu.core_type<tc>} {
    %c0 = arith.constant 0 : index
    %c0_0 = arith.constant 0 : index
    %0 = vector.load %arg3[%c0, %c0_0] : memref<64x256xbf16, #tpu.memory_space<vmem>>, vector<64x256xbf16>
    %c0_1 = arith.constant 0 : index
    %c0_2 = arith.constant 0 : index
    %1 = vector.load %arg4[%c0_1, %c0_2] : memref<16x256xbf16, #tpu.memory_space<vmem>>, vector<16x256xbf16>
    %c0_3 = arith.constant 0 : index
    %c0_4 = arith.constant 0 : index
    %c0_5 = arith.constant 0 : index
    %2 = vector.load %arg1[%c0_3, %c0_4, %c0_5] : memref<2x32x64xbf16, #tpu.memory_space<vmem>>, vector<1x32x64xbf16>
    %3 = vector.shape_cast %2 : vector<1x32x64xbf16> to vector<32x64xbf16>
    %cst = arith.constant dense<0.000000e+00> : vector<32x256xf32>
    %4 = tpu.matmul %3, %0, %cst {dimension_numbers = #tpu.dot_dimension_numbers<[1], [0], [0], [1], [0, 0, 1, 1], [], []>} : vector<32x64xbf16>, vector<64x256xbf16>, vector<32x256xf32> -> vector<32x256xf32>
    %c0_6 = arith.constant 0 : index
    %c0_7 = arith.constant 0 : index
    %c0_8 = arith.constant 0 : index
    %5 = vector.load %arg2[%c0_6, %c0_7, %c0_8] : memref<2x32x16xbf16, #tpu.memory_space<vmem>>, vector<1x32x16xbf16>
    %6 = vector.shape_cast %5 : vector<1x32x16xbf16> to vector<32x16xbf16>
    %cst_9 = arith.constant dense<0.000000e+00> : vector<32x256xf32>
    %7 = tpu.matmul %6, %1, %cst_9 {dimension_numbers = #tpu.dot_dimension_numbers<[1], [0], [0], [1], [0, 0, 1, 1], [], []>} : vector<32x16xbf16>, vector<16x256xbf16>, vector<32x256xf32> -> vector<32x256xf32>
    %c0_10 = arith.constant 0 : index
    %c0_11 = arith.constant 0 : index
    %c0_12 = arith.constant 0 : index
    %8 = vector.load %arg0[%c0_10, %c0_11, %c0_12] : memref<2x32x256xf32, #tpu.memory_space<vmem>>, vector<1x32x256xf32>
    %9 = vector.shape_cast %8 : vector<1x32x256xf32> to vector<32x256xf32>
    %10 = arith.addf %9, %4 : vector<32x256xf32>
    %11 = arith.addf %10, %7 : vector<32x256xf32>
    %c1 = arith.constant 1 : index
    %c0_13 = arith.constant 0 : index
    %c0_14 = arith.constant 0 : index
    %12 = vector.load %arg1[%c1, %c0_13, %c0_14] : memref<2x32x64xbf16, #tpu.memory_space<vmem>>, vector<1x32x64xbf16>
    %13 = vector.shape_cast %12 : vector<1x32x64xbf16> to vector<32x64xbf16>
    %cst_15 = arith.constant dense<0.000000e+00> : vector<32x256xf32>
    %14 = tpu.matmul %13, %0, %cst_15 {dimension_numbers = #tpu.dot_dimension_numbers<[1], [0], [0], [1], [0, 0, 1, 1], [], []>} : vector<32x64xbf16>, vector<64x256xbf16>, vector<32x256xf32> -> vector<32x256xf32>
    %c1_16 = arith.constant 1 : index
    %c0_17 = arith.constant 0 : index
    %c0_18 = arith.constant 0 : index
    %15 = vector.load %arg2[%c1_16, %c0_17, %c0_18] : memref<2x32x16xbf16, #tpu.memory_space<vmem>>, vector<1x32x16xbf16>
    %16 = vector.shape_cast %15 : vector<1x32x16xbf16> to vector<32x16xbf16>
    %cst_19 = arith.constant dense<0.000000e+00> : vector<32x256xf32>
    %17 = tpu.matmul %16, %1, %cst_19 {dimension_numbers = #tpu.dot_dimension_numbers<[1], [0], [0], [1], [0, 0, 1, 1], [], []>} : vector<32x16xbf16>, vector<16x256xbf16>, vector<32x256xf32> -> vector<32x256xf32>
    %c1_20 = arith.constant 1 : index
    %c0_21 = arith.constant 0 : index
    %c0_22 = arith.constant 0 : index
    %18 = vector.load %arg0[%c1_20, %c0_21, %c0_22] : memref<2x32x256xf32, #tpu.memory_space<vmem>>, vector<1x32x256xf32>
    %19 = vector.shape_cast %18 : vector<1x32x256xf32> to vector<32x256xf32>
    %20 = arith.addf %19, %14 : vector<32x256xf32>
    %21 = arith.addf %20, %17 : vector<32x256xf32>
    %22 = tpu.concatenate %11, %21 in 1 : vector<32x256xf32>, vector<32x256xf32> -> vector<32x512xf32>
    %c0_23 = arith.constant 0 : index
    %c0_24 = arith.constant 0 : index
    %23 = vector.load %arg5[%c0_23, %c0_24] : memref<32x32xbf16, #tpu.memory_space<vmem>>, vector<32x32xbf16>
    %24 = arith.truncf %22 : vector<32x512xf32> to vector<32x512xbf16>
    %cst_25 = arith.constant dense<0.000000e+00> : vector<32x512xf32>
    %25 = tpu.matmul %23, %24, %cst_25 {dimension_numbers = #tpu.dot_dimension_numbers<[1], [0], [0], [1], [0, 0, 1, 1], [], []>} : vector<32x32xbf16>, vector<32x512xbf16>, vector<32x512xf32> -> vector<32x512xf32>
    %c0_26 = arith.constant 0 : index
    %c0_27 = arith.constant 0 : index
    %26 = vector.load %arg6[%c0_26, %c0_27] : memref<32x1xf32, #tpu.memory_space<vmem>>, vector<32x1xf32>
    %27 = vector.broadcast %26 : vector<32x1xf32> to vector<32x512xf32>
    %28 = arith.addf %25, %27 : vector<32x512xf32>
    %cst_28 = arith.constant 0.000000e+00 : f32
    %29 = vector.broadcast %cst_28 : f32 to vector<32x512xf32>
    %30 = arith.maximumf %28, %29 : vector<32x512xf32>
    %31 = arith.truncf %30 : vector<32x512xf32> to vector<32x512xbf16>
    %c0_29 = arith.constant 0 : index
    %c0_30 = arith.constant 0 : index
    %32 = vector.load %arg7[%c0_29, %c0_30] : memref<19x32xbf16, #tpu.memory_space<vmem>>, vector<19x32xbf16>
    %cst_31 = arith.constant dense<0.000000e+00> : vector<19x512xf32>
    %33 = tpu.matmul %32, %31, %cst_31 {dimension_numbers = #tpu.dot_dimension_numbers<[1], [0], [0], [1], [0, 0, 1, 1], [], []>} : vector<19x32xbf16>, vector<32x512xbf16>, vector<19x512xf32> -> vector<19x512xf32>
    %c0_32 = arith.constant 0 : index
    %c0_33 = arith.constant 0 : index
    %34 = vector.load %arg8[%c0_32, %c0_33] : memref<19x1xf32, #tpu.memory_space<vmem>>, vector<19x1xf32>
    %35 = vector.broadcast %34 : vector<19x1xf32> to vector<19x512xf32>
    %36 = arith.addf %33, %35 : vector<19x512xf32>
    %37 = vector.extract_strided_slice %36 {offsets = [0, 0], sizes = [19, 256], strides = [1, 1]} : vector<19x512xf32> to vector<19x256xf32>
    %c0_34 = arith.constant 0 : index
    %c0_35 = arith.constant 0 : index
    %c0_36 = arith.constant 0 : index
    %38 = vector.load %arg9[%c0_34, %c0_35, %c0_36] : memref<2x19x256xf32, #tpu.memory_space<vmem>>, vector<1x19x256xf32>
    %39 = vector.shape_cast %38 : vector<1x19x256xf32> to vector<19x256xf32>
    %40 = vector.shape_cast %37 : vector<19x256xf32> to vector<1x19x256xf32>
    tpu.vector_store %arg9[%c0_34, %c0_35, %c0_36], %40 {strides = array<i32>} : memref<2x19x256xf32, #tpu.memory_space<vmem>>, vector<1x19x256xf32>,
    %41 = vector.extract_strided_slice %36 {offsets = [0, 256], sizes = [19, 256], strides = [1, 1]} : vector<19x512xf32> to vector<19x256xf32>
    %c1_37 = arith.constant 1 : index
    %c0_38 = arith.constant 0 : index
    %c0_39 = arith.constant 0 : index
    %42 = vector.load %arg9[%c1_37, %c0_38, %c0_39] : memref<2x19x256xf32, #tpu.memory_space<vmem>>, vector<1x19x256xf32>
    %43 = vector.shape_cast %42 : vector<1x19x256xf32> to vector<19x256xf32>
    %44 = vector.shape_cast %41 : vector<19x256xf32> to vector<1x19x256xf32>
    tpu.vector_store %arg9[%c1_37, %c0_38, %c0_39], %44 {strides = array<i32>} : memref<2x19x256xf32, #tpu.memory_space<vmem>>, vector<1x19x256xf32>,
    return
  }
}

</mosaic_0001>

<llo_original>
// kernel: tpu_custom_call.1
$region0: #{tpu_custom_call.1}
  #allocation0 [shape = 'u32[]', space=smem, size = 0x4, offset = 0x4, fixed_abs, tag = 'smem constant byte address 0x4 - core index']
  #allocation1 [shape = 'u32[72,128]{1,0:T(1,128)}', space=vmem, size = 0x9000, scoped, tag = 'internal scratch']
  %s0 = inlined_call_operand.hbm [shape: f32[2,32,256], index: 0, kind: input, shape index: {}]
  %s1 = inlined_call_operand.hbm [shape: bf16[2,32,64], index: 1, kind: input, shape index: {}]
  %s2 = inlined_call_operand.vmem [shape: bf16[2,32,16], index: 2, kind: input, shape index: {}]
  %s3 = inlined_call_operand.vmem [shape: bf16[64,256], index: 3, kind: input, shape index: {}]
  %s4 = inlined_call_operand.vmem [shape: bf16[16,256], index: 4, kind: input, shape index: {}]
  %s5 = inlined_call_operand.hbm [shape: bf16[32,32], index: 5, kind: input, shape index: {}]
  %s6 = inlined_call_operand.vmem [shape: f32[32,1], index: 6, kind: input, shape index: {}]
  %s7 = inlined_call_operand.hbm [shape: bf16[19,32], index: 7, kind: input, shape index: {}]
  %s8 = inlined_call_operand.vmem [shape: f32[19,1], index: 8, kind: input, shape index: {}]
  %s9 = inlined_call_operand.vmem [shape: f32[2,19,256], index: 9, kind: output, shape index: {}]
  %s10 = sld [smem:[#allocation0]]
  $region62: #{tpu_custom_call.1} parent=0
    _
  %s12 = ssub.s32 1, %s10
  %s13 = scalar_select 0, %s12, %s10
  $region1: #{tpu_custom_call.1} parent=0
    #allocation2 [shape = 'u8[65536]{0}', space=vmem, size = 0x10000, scoped, tag = 'input window, operand 0, single buffered']
    #allocation3 [shape = 's32[1]{0}', space=sflag, size = 0x4, scoped, tag = 'scoped memory for tpu_custom_call.1']
    #allocation4 [shape = 'u8[16384]{0}', space=vmem, size = 0x4000, scoped, tag = 'input window, operand 1, single buffered']
    #allocation5 [shape = 's32[1]{0}', space=sflag, size = 0x4, scoped, tag = 'scoped memory for tpu_custom_call.1']
    #allocation6 [shape = 'u8[8192]{0}', space=vmem, size = 0x2000, scoped, tag = 'input window, operand 5, single buffered']
    #allocation7 [shape = 'u8[6144]{0}', space=vmem, size = 0x1800, scoped, tag = 'input window, operand 7, single buffered']
    #allocation8 [shape = 's32[1]{0}', space=sflag, size = 0x4, scoped, tag = 'scoped memory for tpu_custom_call.1']
    %14 = vsyncpa [#allocation3], 0
    %15 = vsyncpa [#allocation5], 0
    %16 = vsyncpa [#allocation8], 0
    // Predicated region
    $region2: #{tpu_custom_call.1} parent=1 // pred_check
      _
    $region3: #{tpu_custom_call.1} parent=1 // pred_check_branch
      %18 = sbr.rel (0) target = $region5
    $region4: #{tpu_custom_call.1} parent=1 // pred_region
      %20 = vsyncadd [#allocation3], 0
      %s21 = sshll.u32 %s0, 4
      %s22 = int_to_ptr.hbm [resolvable:$true] %s21
      %s23 = sshll.u32 [#allocation2], 4
      %s24 = int_to_ptr.vmem [resolvable:$true] %s23
      %29 = dma.hbm_to_vmem [thread:$0]  %s22, 2048, %s24, [#allocation3], 256, 256, 16
    $region5: #{tpu_custom_call.1} parent=1 // pred_fallthru
      _
    // Predicated region
    $region6: #{tpu_custom_call.1} parent=1 // pred_check
      _
    $region7: #{tpu_custom_call.1} parent=1 // pred_check_branch
      %31 = sbr.rel (0) target = $region9
    $region8: #{tpu_custom_call.1} parent=1 // pred_region
      %33 = vsyncadd [#allocation5], 0
      %s34 = sshll.u32 %s1, 4
      %s35 = int_to_ptr.hbm [resolvable:$true] %s34
      %s36 = sshll.u32 [#allocation4], 4
      %s37 = int_to_ptr.vmem [resolvable:$true] %s36
      %42 = dma.hbm_to_vmem [thread:$0]  %s35, 512, %s37, [#allocation5], 64, 64, 4
    $region9: #{tpu_custom_call.1} parent=1 // pred_fallthru
      _
    // Predicated region
    $region10: #{tpu_custom_call.1} parent=1 // pred_check
      _
    $region11: #{tpu_custom_call.1} parent=1 // pred_check_branch
      %44 = sbr.rel (0) target = $region13
    $region12: #{tpu_custom_call.1} parent=1 // pred_region
      _
    $region13: #{tpu_custom_call.1} parent=1 // pred_fallthru
      _
    // Predicated region
    $region14: #{tpu_custom_call.1} parent=1 // pred_check
      _
    $region15: #{tpu_custom_call.1} parent=1 // pred_check_branch
      %46 = sbr.rel (0) target = $region17
    $region16: #{tpu_custom_call.1} parent=1 // pred_region
      _
    $region17: #{tpu_custom_call.1} parent=1 // pred_fallthru
      _
    // Predicated region
    $region18: #{tpu_custom_call.1} parent=1 // pred_check
      _
    $region19: #{tpu_custom_call.1} parent=1 // pred_check_branch
      %48 = sbr.rel (0) target = $region21
    $region20: #{tpu_custom_call.1} parent=1 // pred_region
      _
    $region21: #{tpu_custom_call.1} parent=1 // pred_fallthru
      _
    // Predicated region
    $region22: #{tpu_custom_call.1} parent=1 // pred_check
      _
    $region23: #{tpu_custom_call.1} parent=1 // pred_check_branch
      %50 = sbr.rel (0) target = $region25
    $region24: #{tpu_custom_call.1} parent=1 // pred_region
      %52 = vsyncadd [#allocation5], 0
      %s53 = sshll.u32 %s5, 4
      %s54 = int_to_ptr.hbm [resolvable:$true] %s53
      %s55 = sshll.u32 [#allocation6], 4
      %s56 = int_to_ptr.vmem [resolvable:$true] %s55
      %61 = dma.hbm_to_vmem [thread:$0]  %s54, 256, %s56, [#allocation5], 64, 64, 4
    $region25: #{tpu_custom_call.1} parent=1 // pred_fallthru
      _
    // Predicated region
    $region26: #{tpu_custom_call.1} parent=1 // pred_check
      _
    $region27: #{tpu_custom_call.1} parent=1 // pred_check_branch
      %63 = sbr.rel (0) target = $region29
    $region28: #{tpu_custom_call.1} parent=1 // pred_region
      _
    $region29: #{tpu_custom_call.1} parent=1 // pred_fallthru
      _
    // Predicated region
    $region30: #{tpu_custom_call.1} parent=1 // pred_check
      _
    $region31: #{tpu_custom_call.1} parent=1 // pred_check_branch
      %65 = sbr.rel (0) target = $region33
    $region32: #{tpu_custom_call.1} parent=1 // pred_region
      %67 = vsyncadd [#allocation8], 0
      %s68 = sshll.u32 %s7, 4
      %s69 = int_to_ptr.hbm [resolvable:$true] %s68
      %s70 = sshll.u32 [#allocation7], 4
      %s71 = int_to_ptr.vmem [resolvable:$true] %s70
      %76 = dma.hbm_to_vmem [thread:$0]  %s69, 192, %s71, [#allocation8], 64, 64, 4
    $region33: #{tpu_custom_call.1} parent=1 // pred_fallthru
      _
    // Predicated region
    $region34: #{tpu_custom_call.1} parent=1 // pred_check
      _
    $region35: #{tpu_custom_call.1} parent=1 // pred_check_branch
      %78 = sbr.rel (0) target = $region37
    $region36: #{tpu_custom_call.1} parent=1 // pred_region
      _
    $region37: #{tpu_custom_call.1} parent=1 // pred_fallthru
      _
    // Predicated region
    $region38: #{tpu_custom_call.1} parent=1 // pred_check
      _
    $region39: #{tpu_custom_call.1} parent=1 // pred_check_branch
      %80 = sbr.rel (0) target = $region41
    $region40: #{tpu_custom_call.1} parent=1 // pred_region
      %82 = dma.done [#allocation3], 2048
    $region41: #{tpu_custom_call.1} parent=1 // pred_fallthru
      _
    // Predicated region
    $region42: #{tpu_custom_call.1} parent=1 // pred_check
      _
    $region43: #{tpu_custom_call.1} parent=1 // pred_check_branch
      %84 = sbr.rel (0) target = $region45
    $region44: #{tpu_custom_call.1} parent=1 // pred_region
      %86 = dma.done [#allocation5], 512
    $region45: #{tpu_custom_call.1} parent=1 // pred_fallthru
      _
    // Predicated region
    $region46: #{tpu_custom_call.1} parent=1 // pred_check
      _
    $region47: #{tpu_custom_call.1} parent=1 // pred_check_branch
      %88 = sbr.rel (0) target = $region49
    $region48: #{tpu_custom_call.1} parent=1 // pred_region
      %90 = dma.done [#allocation5], 256
    $region49: #{tpu_custom_call.1} parent=1 // pred_fallthru
      _
    // Predicated region
    $region50: #{tpu_custom_call.1} parent=1 // pred_check
      _
    $region51: #{tpu_custom_call.1} parent=1 // pred_check_branch
      %92 = sbr.rel (0) target = $region53
    $region52: #{tpu_custom_call.1} parent=1 // pred_region
      %94 = dma.done [#allocation8], 192
    $region53: #{tpu_custom_call.1} parent=1 // pred_fallthru
      _
    %v96 = vld [vmem:[%s3] sm:$0xff]
    %v97 = vld [vmem:[%s3 + $0x8] sm:$0xff]
    %v98 = vld [vmem:[%s3 + $0x10] sm:$0xff]
    %v99 = vld [vmem:[%s3 + $0x18] sm:$0xff]
    %v100 = vld [vmem:[%s3 + $0x20] sm:$0xff]
    %v101 = vld [vmem:[%s3 + $0x28] sm:$0xff]
    %v102 = vld [vmem:[%s3 + $0x30] sm:$0xff]
    %v103 = vld [vmem:[%s3 + $0x38] sm:$0xff]
    %v104 = vld [vmem:[%s4] sm:$0xff]
    %v105 = vld [vmem:[%s4 + $0x8] sm:$0xff]
    %v106 = vld [vmem:[#allocation4] sm:$0xf]
    %v107 = vld [vmem:[#allocation4 + $0x4] sm:$0xf]
    %v108 = vld [vmem:[#allocation4 + $0x8] sm:$0xf]
    %v109 = vld [vmem:[#allocation4 + $0xc] sm:$0xf]
    %v114 = vunpack.c.l.b16 %v106
    %v115 = vunpack.c.l.b16 %v107
    %v116 = vunpack.c.l.b16 %v108
    %v117 = vunpack.c.l.b16 %v109
    %v118 = vpack.c.b16 %v115, %v114
    %v119 = vpack.c.b16 %v117, %v116
    %v128 = vunpack.c.l.b16 %v96
    %v129 = vunpack.c.h.b16 %v96
    %v130 = vunpack.c.l.b16 %v97
    %v131 = vunpack.c.h.b16 %v97
    %v132 = vunpack.c.l.b16 %v98
    %v133 = vunpack.c.h.b16 %v98
    %v134 = vunpack.c.l.b16 %v99
    %v135 = vunpack.c.h.b16 %v99
    %v136 = vunpack.c.l.b16 %v100
    %v137 = vunpack.c.h.b16 %v100
    %v138 = vunpack.c.l.b16 %v101
    %v139 = vunpack.c.h.b16 %v101
    %v140 = vunpack.c.l.b16 %v102
    %v141 = vunpack.c.h.b16 %v102
    %v142 = vunpack.c.l.b16 %v103
    %v143 = vunpack.c.h.b16 %v103
    %v144 = vpack.c.b16 %v130, %v128
    %v145 = vpack.c.b16 %v131, %v129
    %v146 = vpack.c.b16 %v134, %v132
    %v147 = vpack.c.b16 %v135, %v133
    %v148 = vpack.c.b16 %v138, %v136
    %v149 = vpack.c.b16 %v139, %v137
    %v150 = vpack.c.b16 %v142, %v140
    %v151 = vpack.c.b16 %v143, %v141
    %vm160 = vcmask 523264
    %v162 = vsel %vm160, %v118, 0
    %v165 = vsel %vm160, %v119, 0
    %167 = vmatpush.bf16.msra.mxu0 0
    %168 = vmatpush.bf16.msra.mxu0 0
    %169 = vmatpush.bf16.msra.mxu0 0
    %170 = vmatpush.bf16.msra.mxu0 0
    %171 = vmatpush.bf16.msra.mxu0 %v150
    %172 = vmatpush.bf16.msra.mxu0 %v148
    %173 = vmatpush.bf16.msra.mxu0 %v146
    %174 = vmatpush.bf16.msra.mxu0 %v144
    %175 = vmatmul.bf16.gmra.mxu0 %v162
    %v176 = vpop.f32.mrf.mxu0
    %v177 = vadd.f32 0.0, %v176
    %v178 = vpop.f32.mrf.mxu0
    %v179 = vadd.f32 0.0, %v178
    %180 = vmatmul.bf16.gmra.mxu0 %v165
    %v181 = vpop.f32.mrf.mxu0
    %v182 = vadd.f32 0.0, %v181
    %v183 = vpop.f32.mrf.mxu0
    %v184 = vadd.f32 0.0, %v183
    %185 = vdwg.mxu0
    %186 = vmatpush.bf16.msra.mxu0 0
    %187 = vmatpush.bf16.msra.mxu0 0
    %188 = vmatpush.bf16.msra.mxu0 0
    %189 = vmatpush.bf16.msra.mxu0 0
    %190 = vmatpush.bf16.msra.mxu0 %v151
    %191 = vmatpush.bf16.msra.mxu0 %v149
    %192 = vmatpush.bf16.msra.mxu0 %v147
    %193 = vmatpush.bf16.msra.mxu0 %v145
    %194 = vmatmul.bf16.gmra.mxu0 %v162
    %v195 = vpop.f32.mrf.mxu0
    %v196 = vadd.f32 0.0, %v195
    %v197 = vpop.f32.mrf.mxu0
    %v198 = vadd.f32 0.0, %v197
    %199 = vmatmul.bf16.gmra.mxu0 %v165
    %v200 = vpop.f32.mrf.mxu0
    %v201 = vadd.f32 0.0, %v200
    %v202 = vpop.f32.mrf.mxu0
    %v203 = vadd.f32 0.0, %v202
    %204 = vdwg.mxu0
    %v205 = vld [vmem:[%s2] sm:$0xf]
    %v206 = vld [vmem:[%s2 + $0x4] sm:$0xf]
    %v207 = vld [vmem:[%s2 + $0x8] sm:$0xf]
    %v208 = vld [vmem:[%s2 + $0xc] sm:$0xf]
    %v213 = vunpack.c.l.b16 %v205
    %v214 = vunpack.c.l.b16 %v206
    %v215 = vunpack.c.l.b16 %v207
    %v216 = vunpack.c.l.b16 %v208
    %v217 = vpack.c.b16 %v214, %v213
    %v218 = vpack.c.b16 %v216, %v215
    %v221 = vunpack.c.l.b16 %v104
    %v222 = vunpack.c.h.b16 %v104
    %v223 = vunpack.c.l.b16 %v105
    %v224 = vunpack.c.h.b16 %v105
    %v225 = vpack.c.b16 %v223, %v221
    %v226 = vpack.c.b16 %v224, %v222
    %vm229 = vcmask 130048
    %v231 = vsel %vm229, %v217, 0
    %v234 = vsel %vm229, %v218, 0
    %236 = vmatpush.bf16.msra.mxu0 0
    %237 = vmatpush.bf16.msra.mxu0 0
    %238 = vmatpush.bf16.msra.mxu0 0
    %239 = vmatpush.bf16.msra.mxu0 0
    %240 = vmatpush.bf16.msra.mxu0 0
    %241 = vmatpush.bf16.msra.mxu0 0
    %242 = vmatpush.bf16.msra.mxu0 0
    %243 = vmatpush.bf16.msra.mxu0 %v225
    %244 = vmatmul.bf16.gmra.mxu0 %v231
    %v245 = vpop.f32.mrf.mxu0
    %v246 = vadd.f32 0.0, %v245
    %v247 = vpop.f32.mrf.mxu0
    %v248 = vadd.f32 0.0, %v247
    %249 = vmatmul.bf16.gmra.mxu0 %v234
    %v250 = vpop.f32.mrf.mxu0
    %v251 = vadd.f32 0.0, %v250
    %v252 = vpop.f32.mrf.mxu0
    %v253 = vadd.f32 0.0, %v252
    %254 = vdwg.mxu0
    %255 = vmatpush.bf16.msra.mxu0 0
    %256 = vmatpush.bf16.msra.mxu0 0
    %257 = vmatpush.bf16.msra.mxu0 0
    %258 = vmatpush.bf16.msra.mxu0 0
    %259 = vmatpush.bf16.msra.mxu0 0
    %260 = vmatpush.bf16.msra.mxu0 0
    %261 = vmatpush.bf16.msra.mxu0 0
    %262 = vmatpush.bf16.msra.mxu0 %v226
    %263 = vmatmul.bf16.gmra.mxu0 %v231
    %v264 = vpop.f32.mrf.mxu0
    %v265 = vadd.f32 0.0, %v264
    %v266 = vpop.f32.mrf.mxu0
    %v267 = vadd.f32 0.0, %v266
    %268 = vmatmul.bf16.gmra.mxu0 %v234
    %v269 = vpop.f32.mrf.mxu0
    %v270 = vadd.f32 0.0, %v269
    %v271 = vpop.f32.mrf.mxu0
    %v272 = vadd.f32 0.0, %v271
    %273 = vdwg.mxu0
    %v274 = vld [vmem:[#allocation2] sm:$0xff]
    %v275 = vld [vmem:[#allocation2 + $0x8] sm:$0xff]
    %v276 = vld [vmem:[#allocation2 + $0x10] sm:$0xff]
    %v277 = vld [vmem:[#allocation2 + $0x18] sm:$0xff]
    %v278 = vld [vmem:[#allocation2 + $0x20] sm:$0xff]
    %v279 = vld [vmem:[#allocation2 + $0x28] sm:$0xff]
    %v280 = vld [vmem:[#allocation2 + $0x30] sm:$0xff]
    %v281 = vld [vmem:[#allocation2 + $0x38] sm:$0xff]
    %v282 = vadd.f32 %v274, %v177
    %v283 = vadd.f32 %v275, %v196
    %v284 = vadd.f32 %v276, %v179
    %v285 = vadd.f32 %v277, %v198
    %v286 = vadd.f32 %v278, %v182
    %v287 = vadd.f32 %v279, %v201
    %v288 = vadd.f32 %v280, %v184
    %v289 = vadd.f32 %v281, %v203
    %v290 = vadd.f32 %v282, %v246
    %v291 = vadd.f32 %v283, %v265
    %v292 = vadd.f32 %v284, %v248
    %v293 = vadd.f32 %v285, %v267
    %v294 = vadd.f32 %v286, %v251
    %v295 = vadd.f32 %v287, %v270
    %v296 = vadd.f32 %v288, %v253
    %v297 = vadd.f32 %v289, %v272
    %s298 = scalar_lea.vmem [#allocation4], 16
    %v299 = vld [vmem:[%s298] sm:$0xf]
    %v300 = vld [vmem:[%s298 + $0x4] sm:$0xf]
    %v301 = vld [vmem:[%s298 + $0x8] sm:$0xf]
    %v302 = vld [vmem:[%s298 + $0xc] sm:$0xf]
    %v307 = vunpack.c.l.b16 %v299
    %v308 = vunpack.c.l.b16 %v300
    %v309 = vunpack.c.l.b16 %v301
    %v310 = vunpack.c.l.b16 %v302
    %v311 = vpack.c.b16 %v308, %v307
    %v312 = vpack.c.b16 %v310, %v309
    %v314 = vsel %vm160, %v311, 0
    %v317 = vsel %vm160, %v312, 0
    %319 = vmatpush.bf16.msra.mxu0 0
    %320 = vmatpush.bf16.msra.mxu0 0
    %321 = vmatpush.bf16.msra.mxu0 0
    %322 = vmatpush.bf16.msra.mxu0 0
    %323 = vmatpush.bf16.msra.mxu0 %v150
    %324 = vmatpush.bf16.msra.mxu0 %v148
    %325 = vmatpush.bf16.msra.mxu0 %v146
    %326 = vmatpush.bf16.msra.mxu0 %v144
    %327 = vmatmul.bf16.gmra.mxu0 %v314
    %v328 = vpop.f32.mrf.mxu0
    %v329 = vadd.f32 0.0, %v328
    %v330 = vpop.f32.mrf.mxu0
    %v331 = vadd.f32 0.0, %v330
    %332 = vmatmul.bf16.gmra.mxu0 %v317
    %v333 = vpop.f32.mrf.mxu0
    %v334 = vadd.f32 0.0, %v333
    %v335 = vpop.f32.mrf.mxu0
    %v336 = vadd.f32 0.0, %v335
    %337 = vdwg.mxu0
    %338 = vmatpush.bf16.msra.mxu0 0
    %339 = vmatpush.bf16.msra.mxu0 0
    %340 = vmatpush.bf16.msra.mxu0 0
    %341 = vmatpush.bf16.msra.mxu0 0
    %342 = vmatpush.bf16.msra.mxu0 %v151
    %343 = vmatpush.bf16.msra.mxu0 %v149
    %344 = vmatpush.bf16.msra.mxu0 %v147
    %345 = vmatpush.bf16.msra.mxu0 %v145
    %346 = vmatmul.bf16.gmra.mxu0 %v314
    %v347 = vpop.f32.mrf.mxu0
    %v348 = vadd.f32 0.0, %v347
    %v349 = vpop.f32.mrf.mxu0
    %v350 = vadd.f32 0.0, %v349
    %351 = vmatmul.bf16.gmra.mxu0 %v317
    %v352 = vpop.f32.mrf.mxu0
    %v353 = vadd.f32 0.0, %v352
    %v354 = vpop.f32.mrf.mxu0
    %v355 = vadd.f32 0.0, %v354
    %356 = vdwg.mxu0
    %s357 = scalar_lea.vmem %s2, 16
    %v358 = vld [vmem:[%s357] sm:$0xf]
    %v359 = vld [vmem:[%s357 + $0x4] sm:$0xf]
    %v360 = vld [vmem:[%s357 + $0x8] sm:$0xf]
    %v361 = vld [vmem:[%s357 + $0xc] sm:$0xf]
    %v366 = vunpack.c.l.b16 %v358
    %v367 = vunpack.c.l.b16 %v359
    %v368 = vunpack.c.l.b16 %v360
    %v369 = vunpack.c.l.b16 %v361
    %v370 = vpack.c.b16 %v367, %v366
    %v371 = vpack.c.b16 %v369, %v368
    %v373 = vsel %vm229, %v370, 0
    %v376 = vsel %vm229, %v371, 0
    %378 = vmatpush.bf16.msra.mxu0 0
    %379 = vmatpush.bf16.msra.mxu0 0
    %380 = vmatpush.bf16.msra.mxu0 0
    %381 = vmatpush.bf16.msra.mxu0 0
    %382 = vmatpush.bf16.msra.mxu0 0
    %383 = vmatpush.bf16.msra.mxu0 0
    %384 = vmatpush.bf16.msra.mxu0 0
    %385 = vmatpush.bf16.msra.mxu0 %v225
    %386 = vmatmul.bf16.gmra.mxu0 %v373
    %v387 = vpop.f32.mrf.mxu0
    %v388 = vadd.f32 0.0, %v387
    %v389 = vpop.f32.mrf.mxu0
    %v390 = vadd.f32 0.0, %v389
    %391 = vmatmul.bf16.gmra.mxu0 %v376
    %v392 = vpop.f32.mrf.mxu0
    %v393 = vadd.f32 0.0, %v392
    %v394 = vpop.f32.mrf.mxu0
    %v395 = vadd.f32 0.0, %v394
    %396 = vdwg.mxu0
    %397 = vmatpush.bf16.msra.mxu0 0
    %398 = vmatpush.bf16.msra.mxu0 0
    %399 = vmatpush.bf16.msra.mxu0 0
    %400 = vmatpush.bf16.msra.mxu0 0
    %401 = vmatpush.bf16.msra.mxu0 0
    %402 = vmatpush.bf16.msra.mxu0 0
    %403 = vmatpush.bf16.msra.mxu0 0
    %404 = vmatpush.bf16.msra.mxu0 %v226
    %405 = vmatmul.bf16.gmra.mxu0 %v373
    %v406 = vpop.f32.mrf.mxu0
    %v407 = vadd.f32 0.0, %v406
    %v408 = vpop.f32.mrf.mxu0
    %v409 = vadd.f32 0.0, %v408
    %410 = vmatmul.bf16.gmra.mxu0 %v376
    %v411 = vpop.f32.mrf.mxu0
    %v412 = vadd.f32 0.0, %v411
    %v413 = vpop.f32.mrf.mxu0
    %v414 = vadd.f32 0.0, %v413
    %415 = vdwg.mxu0
    %s416 = scalar_lea.vmem [#allocation2], 64
    %v417 = vld [vmem:[%s416] sm:$0xff]
    %v418 = vld [vmem:[%s416 + $0x8] sm:$0xff]
    %v419 = vld [vmem:[%s416 + $0x10] sm:$0xff]
    %v420 = vld [vmem:[%s416 + $0x18] sm:$0xff]
    %v421 = vld [vmem:[%s416 + $0x20] sm:$0xff]
    %v422 = vld [vmem:[%s416 + $0x28] sm:$0xff]
    %v423 = vld [vmem:[%s416 + $0x30] sm:$0xff]
    %v424 = vld [vmem:[%s416 + $0x38] sm:$0xff]
    %v425 = vadd.f32 %v417, %v329
    %v426 = vadd.f32 %v418, %v348
    %v427 = vadd.f32 %v419, %v331
    %v428 = vadd.f32 %v420, %v350
    %v429 = vadd.f32 %v421, %v334
    %v430 = vadd.f32 %v422, %v353
    %v431 = vadd.f32 %v423, %v336
    %v432 = vadd.f32 %v424, %v355
    %v433 = vadd.f32 %v425, %v388
    %v434 = vadd.f32 %v426, %v407
    %v435 = vadd.f32 %v427, %v390
    %v436 = vadd.f32 %v428, %v409
    %v437 = vadd.f32 %v429, %v393
    %v438 = vadd.f32 %v430, %v412
    %v439 = vadd.f32 %v431, %v395
    %v440 = vadd.f32 %v432, %v414
    %v441 = vld [vmem:[#allocation6] sm:$0xf]
    %v442 = vld [vmem:[#allocation6 + $0x4] sm:$0xf]
    %v443 = vld [vmem:[#allocation6 + $0x8] sm:$0xf]
    %v444 = vld [vmem:[#allocation6 + $0xc] sm:$0xf]
    %v445 = vpack.c.bf16 %v292, %v290
    %v446 = vpack.c.bf16 %v293, %v291
    %v447 = vpack.c.bf16 %v435, %v433
    %v448 = vpack.c.bf16 %v436, %v434
    %v449 = vpack.c.bf16 %v296, %v294
    %v450 = vpack.c.bf16 %v297, %v295
    %v451 = vpack.c.bf16 %v439, %v437
    %v452 = vpack.c.bf16 %v440, %v438
    %v453 = vld [vmem:[%s6] sm:$0xff]
    %v454 = vld [vmem:[%s6 + $0x8] sm:$0xff]
    %v455 = vld [vmem:[%s6 + $0x10] sm:$0xff]
    %v456 = vld [vmem:[%s6 + $0x18] sm:$0xff]
    %458 = vset.pattern.permute.xlu0 0
    %459 = vperm.xlu0 %458, %v453
    %v460 = vpop.permute.xlu0 %459
    %463 = vset.pattern.permute.xlu0 0
    %464 = vperm.xlu0 %463, %v454
    %v465 = vpop.permute.xlu0 %464
    %468 = vset.pattern.permute.xlu0 0
    %469 = vperm.xlu0 %468, %v455
    %v470 = vpop.permute.xlu0 %469
    %473 = vset.pattern.permute.xlu0 0
    %474 = vperm.xlu0 %473, %v456
    %v475 = vpop.permute.xlu0 %474
    %v481 = vunpack.c.l.b16 %v441
    %v482 = vunpack.c.l.b16 %v442
    %v483 = vunpack.c.l.b16 %v443
    %v484 = vunpack.c.l.b16 %v444
    %v485 = vpack.c.b16 %v482, %v481
    %v486 = vpack.c.b16 %v484, %v483
    %vm487 = vcmask 261120
    %v489 = vsel %vm487, %v485, 0
    %v492 = vsel %vm487, %v486, 0
    %494 = vmatpush.bf16.msra.mxu0 0
    %495 = vmatpush.bf16.msra.mxu0 0
    %496 = vmatpush.bf16.msra.mxu0 0
    %497 = vmatpush.bf16.msra.mxu0 0
    %498 = vmatpush.bf16.msra.mxu0 0
    %499 = vmatpush.bf16.msra.mxu0 0
    %500 = vmatpush.bf16.msra.mxu0 %v449
    %501 = vmatpush.bf16.msra.mxu0 %v445
    %502 = vmatmul.bf16.gmra.mxu0 %v489
    %v503 = vpop.f32.mrf.mxu0
    %v504 = vadd.f32 %v460, %v503
    %v505 = vpop.f32.mrf.mxu0
    %v506 = vadd.f32 %v465, %v505
    %507 = vmatmul.bf16.gmra.mxu0 %v492
    %v508 = vpop.f32.mrf.mxu0
    %v509 = vadd.f32 %v470, %v508
    %v510 = vpop.f32.mrf.mxu0
    %v511 = vadd.f32 %v475, %v510
    %512 = vdwg.mxu0
    %513 = vmatpush.bf16.msra.mxu0 0
    %514 = vmatpush.bf16.msra.mxu0 0
    %515 = vmatpush.bf16.msra.mxu0 0
    %516 = vmatpush.bf16.msra.mxu0 0
    %517 = vmatpush.bf16.msra.mxu0 0
    %518 = vmatpush.bf16.msra.mxu0 0
    %519 = vmatpush.bf16.msra.mxu0 %v450
    %520 = vmatpush.bf16.msra.mxu0 %v446
    %521 = vmatmul.bf16.gmra.mxu0 %v489
    %v522 = vpop.f32.mrf.mxu0
    %v523 = vadd.f32 %v460, %v522
    %v524 = vpop.f32.mrf.mxu0
    %v525 = vadd.f32 %v465, %v524
    %526 = vmatmul.bf16.gmra.mxu0 %v492
    %v527 = vpop.f32.mrf.mxu0
    %v528 = vadd.f32 %v470, %v527
    %v529 = vpop.f32.mrf.mxu0
    %v530 = vadd.f32 %v475, %v529
    %531 = vdwg.mxu0
    %532 = vmatpush.bf16.msra.mxu0 0
    %533 = vmatpush.bf16.msra.mxu0 0
    %534 = vmatpush.bf16.msra.mxu0 0
    %535 = vmatpush.bf16.msra.mxu0 0
    %536 = vmatpush.bf16.msra.mxu0 0
    %537 = vmatpush.bf16.msra.mxu0 0
    %538 = vmatpush.bf16.msra.mxu0 %v451
    %539 = vmatpush.bf16.msra.mxu0 %v447
    %540 = vmatmul.bf16.gmra.mxu0 %v489
    %v541 = vpop.f32.mrf.mxu0
    %v542 = vadd.f32 %v460, %v541
    %v543 = vpop.f32.mrf.mxu0
    %v544 = vadd.f32 %v465, %v543
    %545 = vmatmul.bf16.gmra.mxu0 %v492
    %v546 = vpop.f32.mrf.mxu0
    %v547 = vadd.f32 %v470, %v546
    %v548 = vpop.f32.mrf.mxu0
    %v549 = vadd.f32 %v475, %v548
    %550 = vdwg.mxu0
    %551 = vmatpush.bf16.msra.mxu0 0
    %552 = vmatpush.bf16.msra.mxu0 0
    %553 = vmatpush.bf16.msra.mxu0 0
    %554 = vmatpush.bf16.msra.mxu0 0
    %555 = vmatpush.bf16.msra.mxu0 0
    %556 = vmatpush.bf16.msra.mxu0 0
    %557 = vmatpush.bf16.msra.mxu0 %v452
    %558 = vmatpush.bf16.msra.mxu0 %v448
    %559 = vmatmul.bf16.gmra.mxu0 %v489
    %v560 = vpop.f32.mrf.mxu0
    %v561 = vadd.f32 %v460, %v560
    %v562 = vpop.f32.mrf.mxu0
    %v563 = vadd.f32 %v465, %v562
    %564 = vmatmul.bf16.gmra.mxu0 %v492
    %v565 = vpop.f32.mrf.mxu0
    %v566 = vadd.f32 %v470, %v565
    %v567 = vpop.f32.mrf.mxu0
    %v568 = vadd.f32 %v475, %v567
    %569 = vdwg.mxu0
    %v570 = vmax.f32 %v504, 0.0
    %v571 = vmax.f32 %v523, 0.0
    %v572 = vmax.f32 %v542, 0.0
    %v573 = vmax.f32 %v561, 0.0
    %v574 = vmax.f32 %v506, 0.0
    %v575 = vmax.f32 %v525, 0.0
    %v576 = vmax.f32 %v544, 0.0
    %v577 = vmax.f32 %v563, 0.0
    %v578 = vmax.f32 %v509, 0.0
    %v579 = vmax.f32 %v528, 0.0
    %v580 = vmax.f32 %v547, 0.0
    %v581 = vmax.f32 %v566, 0.0
    %v582 = vmax.f32 %v511, 0.0
    %v583 = vmax.f32 %v530, 0.0
    %v584 = vmax.f32 %v549, 0.0
    %v585 = vmax.f32 %v568, 0.0
    %v586 = vpack.c.bf16 %v574, %v570
    %v587 = vpack.c.bf16 %v575, %v571
    %v588 = vpack.c.bf16 %v576, %v572
    %v589 = vpack.c.bf16 %v577, %v573
    %v590 = vpack.c.bf16 %v582, %v578
    %v591 = vpack.c.bf16 %v583, %v579
    %v592 = vpack.c.bf16 %v584, %v580
    %v593 = vpack.c.bf16 %v585, %v581
    %v594 = vld [vmem:[#allocation7] sm:$0xf]
    %v595 = vld [vmem:[#allocation7 + $0x4] sm:$0xf]
    %v596 = vld [vmem:[#allocation7 + $0x8] sm:$0x3]
    %v597 = vld [vmem:[%s8] sm:$0xff]
    %v598 = vld [vmem:[%s8 + $0x8] sm:$0xff]
    %v599 = vld [vmem:[%s8 + $0x10] sm:$0x7]
    %601 = vset.pattern.permute.xlu0 0
    %602 = vperm.xlu0 %601, %v597
    %v603 = vpop.permute.xlu0 %602
    %606 = vset.pattern.permute.xlu0 0
    %607 = vperm.xlu0 %606, %v598
    %v608 = vpop.permute.xlu0 %607
    %611 = vset.pattern.permute.xlu0 0
    %612 = vperm.xlu0 %611, %v599
    %v613 = vpop.permute.xlu0 %612
    %v618 = vunpack.c.l.b16 %v594
    %v619 = vunpack.c.l.b16 %v595
    %v620 = vunpack.c.l.b16 %v596
    %v621 = vpack.c.b16 %v619, %v618
    %v622 = vpack.c.b16 %v620, %v620
    %v624 = vsel %vm487, %v621, 0
    %v627 = vsel %vm487, %v622, 0
    %629 = vmatpush.bf16.msra.mxu0 0
    %630 = vmatpush.bf16.msra.mxu0 0
    %631 = vmatpush.bf16.msra.mxu0 0
    %632 = vmatpush.bf16.msra.mxu0 0
    %633 = vmatpush.bf16.msra.mxu0 0
    %634 = vmatpush.bf16.msra.mxu0 0
    %635 = vmatpush.bf16.msra.mxu0 %v590
    %636 = vmatpush.bf16.msra.mxu0 %v586
    %637 = vmatmul.bf16.gmra.mxu0 %v624
    %v638 = vpop.f32.mrf.mxu0
    %v639 = vadd.f32 %v603, %v638
    %v640 = vpop.f32.mrf.mxu0
    %v641 = vadd.f32 %v608, %v640
    %642 = vmatmul.bf16.gmra.mxu0 %v627
    %v643 = vpop.f32.mrf.mxu0
    %v644 = vadd.f32 %v613, %v643
    %v645 = vpop.f32.mrf.mxu0
    %646 = vdwg.mxu0
    %647 = vmatpush.bf16.msra.mxu0 0
    %648 = vmatpush.bf16.msra.mxu0 0
    %649 = vmatpush.bf16.msra.mxu0 0
    %650 = vmatpush.bf16.msra.mxu0 0
    %651 = vmatpush.bf16.msra.mxu0 0
    %652 = vmatpush.bf16.msra.mxu0 0
    %653 = vmatpush.bf16.msra.mxu0 %v591
    %654 = vmatpush.bf16.msra.mxu0 %v587
    %655 = vmatmul.bf16.gmra.mxu0 %v624
    %v656 = vpop.f32.mrf.mxu0
    %v657 = vadd.f32 %v603, %v656
    %v658 = vpop.f32.mrf.mxu0
    %v659 = vadd.f32 %v608, %v658
    %660 = vmatmul.bf16.gmra.mxu0 %v627
    %v661 = vpop.f32.mrf.mxu0
    %v662 = vadd.f32 %v613, %v661
    %v663 = vpop.f32.mrf.mxu0
    %664 = vdwg.mxu0
    %665 = vmatpush.bf16.msra.mxu0 0
    %666 = vmatpush.bf16.msra.mxu0 0
    %667 = vmatpush.bf16.msra.mxu0 0
    %668 = vmatpush.bf16.msra.mxu0 0
    %669 = vmatpush.bf16.msra.mxu0 0
    %670 = vmatpush.bf16.msra.mxu0 0
    %671 = vmatpush.bf16.msra.mxu0 %v592
    %672 = vmatpush.bf16.msra.mxu0 %v588
    %673 = vmatmul.bf16.gmra.mxu0 %v624
    %v674 = vpop.f32.mrf.mxu0
    %v675 = vadd.f32 %v603, %v674
    %v676 = vpop.f32.mrf.mxu0
    %v677 = vadd.f32 %v608, %v676
    %678 = vmatmul.bf16.gmra.mxu0 %v627
    %v679 = vpop.f32.mrf.mxu0
    %v680 = vadd.f32 %v613, %v679
    %v681 = vpop.f32.mrf.mxu0
    %682 = vdwg.mxu0
    %683 = vmatpush.bf16.msra.mxu0 0
    %684 = vmatpush.bf16.msra.mxu0 0
    %685 = vmatpush.bf16.msra.mxu0 0
    %686 = vmatpush.bf16.msra.mxu0 0
    %687 = vmatpush.bf16.msra.mxu0 0
    %688 = vmatpush.bf16.msra.mxu0 0
    %689 = vmatpush.bf16.msra.mxu0 %v593
    %690 = vmatpush.bf16.msra.mxu0 %v589
    %691 = vmatmul.bf16.gmra.mxu0 %v624
    %v692 = vpop.f32.mrf.mxu0
    %v693 = vadd.f32 %v603, %v692
    %v694 = vpop.f32.mrf.mxu0
    %v695 = vadd.f32 %v608, %v694
    %696 = vmatmul.bf16.gmra.mxu0 %v627
    %v697 = vpop.f32.mrf.mxu0
    %v698 = vadd.f32 %v613, %v697
    %v699 = vpop.f32.mrf.mxu0
    %700 = vdwg.mxu0
    %701 = vst [vmem:[%s9] sm:$0xff] %v639
    %702 = vst [vmem:[%s9 + $0x8] sm:$0xff] %v657
    %703 = vst [vmem:[%s9 + $0x10] sm:$0xff] %v641
    %704 = vst [vmem:[%s9 + $0x18] sm:$0xff] %v659
    %705 = vst [vmem:[%s9 + $0x20] sm:$0x7] %v644
    %706 = vst [vmem:[%s9 + $0x28] sm:$0x7] %v662
    %s707 = scalar_lea.vmem %s9, 48
    %708 = vst [vmem:[%s707] sm:$0xff] %v675
    %709 = vst [vmem:[%s707 + $0x8] sm:$0xff] %v693
    %710 = vst [vmem:[%s707 + $0x10] sm:$0xff] %v677
    %711 = vst [vmem:[%s707 + $0x18] sm:$0xff] %v695
    %712 = vst [vmem:[%s707 + $0x20] sm:$0x7] %v680
    %713 = vst [vmem:[%s707 + $0x28] sm:$0x7] %v698
    // Predicated region
    $region54: #{tpu_custom_call.1} parent=1 // pred_check
      _
    $region55: #{tpu_custom_call.1} parent=1 // pred_check_branch
      %715 = sbr.rel (0) target = $region57
    $region56: #{tpu_custom_call.1} parent=1 // pred_region
      _
    $region57: #{tpu_custom_call.1} parent=1 // pred_fallthru
      _
    // Predicated region
    $region58: #{tpu_custom_call.1} parent=1 // pred_check
      _
    $region59: #{tpu_custom_call.1} parent=1 // pred_check_branch
      %717 = sbr.rel (0) target = $region61
    $region60: #{tpu_custom_call.1} parent=1 // pred_region
      _
    $region61: #{tpu_custom_call.1} parent=1 // pred_fallthru
      _
    %718 = vsyncpa [#allocation3], 1
    %719 = vsyncpa [#allocation5], 1
    %720 = vsyncpa [#allocation8], 1

</llo_original>
